<compile_context>
chip_gen: v6e
topology: v6e:2x2x1
jax: 0.10.0
libtpu: 0.0.40
codegen_flags: <defaults>
</compile_context>

<pallas_src>
import functools

import jax
import jax.numpy as jnp
import numpy as np
from jax import lax
from jax.experimental import pallas as pl
from jax.experimental.pallas import tpu as pltpu


# --------------------------------------------------------------------------- #
# Fused single-step kernel: stats + normalize, whole (N, D) slab in VMEM.
# --------------------------------------------------------------------------- #
def _fused_bn_kernel(x_ref, gb_ref, o_ref, *, eps, n_rows):
    x = x_ref[...].astype(jnp.float32)                              # (N, D)
    inv_n = jnp.float32(1.0 / n_rows)
    mean = jnp.sum(x, axis=0, keepdims=True) * inv_n                # (1, D)
    centered = x - mean
    var = jnp.sum(centered * centered, axis=0, keepdims=True) * inv_n
    scale = gb_ref[0:1, :] * lax.rsqrt(var + jnp.float32(eps))      # gamma * rsqrt(var+eps)
    o_ref[...] = (centered * scale + gb_ref[1:2, :]).astype(o_ref.dtype)


# --------------------------------------------------------------------------- #
# Tiled two-pass path (large B*S): pass 1 accumulates per-channel sums,
# pass 2 applies the precomputed per-channel affine.
# --------------------------------------------------------------------------- #
def _stats_kernel(x_ref, sum_ref, ssq_ref):
    @pl.when(pl.program_id(0) == 0)
    def _():
        sum_ref[...] = jnp.zeros_like(sum_ref)
        ssq_ref[...] = jnp.zeros_like(ssq_ref)

    x = x_ref[...].astype(jnp.float32)                              # (TR, D)
    sum_ref[...] += jnp.sum(x, axis=0, keepdims=True)
    ssq_ref[...] += jnp.sum(x * x, axis=0, keepdims=True)


def _affine_kernel(x_ref, ss_ref, o_ref):
    x = x_ref[...].astype(jnp.float32)                              # (TR, D)
    o_ref[...] = (x * ss_ref[0:1, :] + ss_ref[1:2, :]).astype(o_ref.dtype)


# --------------------------------------------------------------------------- #
# Wrapper
# --------------------------------------------------------------------------- #
def patchtsmixervae_batchnorm(x, gamma, beta, *, eps=1e-5,
                              max_fused_rows=1024, row_tile=256):
    """x: (B, S, D).  gamma/beta: (D,).  Returns (B, S, D)."""
    B, S, D = x.shape
    N = B * S
    x2d = x.reshape(N, D)

    if N <= max_fused_rows:
        # --- small / typical PatchTSMixer sizes: one grid step, fully fused ---
        gb = jnp.stack([gamma, beta]).astype(jnp.float32)           # (2, D)
        kernel = functools.partial(_fused_bn_kernel, eps=float(eps), n_rows=N)
        out = pl.pallas_call(
            kernel,
            out_shape=jax.ShapeDtypeStruct((N, D), x.dtype),
            grid=(1,),
            in_specs=[
                pl.BlockSpec((N, D), lambda i: (0, 0)),
                pl.BlockSpec((2, D), lambda i: (0, 0)),
            ],
            out_specs=pl.BlockSpec((N, D), lambda i: (0, 0)),
            compiler_params=pltpu.CompilerParams(
                dimension_semantics=("arbitrary",)),
        )(x2d, gb)
        return out.reshape(B, S, D)

    # --- large B*S: row tiles, two passes ---
    n_tiles = pl.cdiv(N, row_tile)
    Np = n_tiles * row_tile
    if Np != N:
        # zero rows contribute 0 to sum/sumsq; we divide by the true N below.
        x2d = jnp.pad(x2d, ((0, Np - N), (0, 0)))

    sums, ssqs = pl.pallas_call(
        _stats_kernel,
        out_shape=(jax.ShapeDtypeStruct((1, D), jnp.float32),
                   jax.ShapeDtypeStruct((1, D), jnp.float32)),
        grid=(n_tiles,),
        in_specs=[pl.BlockSpec((row_tile, D), lambda t: (t, 0))],
        out_specs=(pl.BlockSpec((1, D), lambda t: (0, 0)),
                   pl.BlockSpec((1, D), lambda t: (0, 0))),
        compiler_params=pltpu.CompilerParams(
            dimension_semantics=("arbitrary",)),
    )(x2d)

    # Per-channel (D,) math is trivial: fold mean/var/gamma/beta into scale/shift.
    mean = sums[0] / N
    var = ssqs[0] / N - mean * mean
    scale = gamma.astype(jnp.float32) * lax.rsqrt(var + jnp.float32(eps))
    shift = beta.astype(jnp.float32) - mean * scale
    ss = jnp.stack([scale, shift])                                  # (2, D)

    out = pl.pallas_call(
        _affine_kernel,
        out_shape=jax.ShapeDtypeStruct((Np, D), x.dtype),
        grid=(n_tiles,),
        in_specs=[pl.BlockSpec((row_tile, D), lambda t: (t, 0)),
                  pl.BlockSpec((2, D), lambda t: (0, 0))],
        out_specs=pl.BlockSpec((row_tile, D), lambda t: (t, 0)),
        compiler_params=pltpu.CompilerParams(
            dimension_semantics=("parallel",)),
    )(x2d, ss)
    return out[:N].reshape(B, S, D)


# --------------------------------------------------------------------------- #
# Pure-JAX reference (mirrors PyTorch BatchNorm1d training-mode forward).
# --------------------------------------------------------------------------- #
def _reference_batchnorm(x, gamma, beta, eps):
    B, S, D = x.shape
    xf = x.reshape(B * S, D).astype(jnp.float32)
    mean = jnp.mean(xf, axis=0)
    var = jnp.mean((xf - mean) ** 2, axis=0)        # biased variance
    y = (xf - mean) / jnp.sqrt(var + eps) * gamma + beta
    return y.reshape(B, S, D).astype(x.dtype)

# TODO(synk): eval-mode (running-stats) forward and the in-place running_mean /
# running_var buffer updates are PyTorch-side module state; eval mode reduces to
# the same per-channel affine as _affine_kernel with
# scale = gamma * rsqrt(running_var + eps), shift = beta - running_mean * scale.


if __name__ == "__main__":
    eps = 1e-5

    # Small shapes consistent with the module: batch=2, seq(num_patches)=8, d_model=32.
    B, S, D = 2, 8, 32
    key = jax.random.PRNGKey(0)
    kx, kg, kb, kx2 = jax.random.split(key, 4)

    x = jax.random.normal(kx, (B, S, D), dtype=jnp.float32)
    gamma = 1.0 + 0.02 * jax.random.normal(kg, (D,), dtype=jnp.float32)
    beta = 0.02 * jax.random.normal(kb, (D,), dtype=jnp.float32)

    out = jax.block_until_ready(patchtsmixervae_batchnorm(x, gamma, beta, eps=eps))
    ref = jax.block_until_ready(_reference_batchnorm(x, gamma, beta, eps))
    np.testing.assert_allclose(np.asarray(out), np.asarray(ref), rtol=1e-5, atol=1e-5)

    # Also exercise the row-tiled two-pass path (larger B*S, with ragged padding).
    B2, S2, D2 = 4, 400, 16
    x2 = jax.random.normal(kx2, (B2, S2, D2), dtype=jnp.float32)
    g2 = gamma[:D2]
    b2 = beta[:D2]
    out2 = jax.block_until_ready(
        patchtsmixervae_batchnorm(x2, g2, b2, eps=eps,
                                  max_fused_rows=1024, row_tile=256))
    ref2 = jax.block_until_ready(_reference_batchnorm(x2, g2, b2, eps))
    np.testing.assert_allclose(np.asarray(out2), np.asarray(ref2), rtol=1e-4, atol=1e-4)

    print("KERNEL_OK")
</pallas_src>

<mosaic_0001>
module attributes {stable_mosaic.version = 11 : i64} {
  func.func @_fused_bn_kernel(%arg0: i32, %arg1: memref<16x32xf32, #tpu.memory_space<vmem>>, %arg2: memref<2x32xf32, #tpu.memory_space<vmem>>, %arg3: memref<16x32xf32, #tpu.memory_space<vmem>>) attributes {dimension_semantics = [#tpu.dimension_semantics<arbitrary>], iteration_bounds = array<i64: 1>, scalar_prefetch = 0 : i64, scratch_operands = 0 : i64, tpu.core_type = #tpu.core_type<tc>, window_params = [{pipeline_mode = #tpu.pipeline_mode<synchronous>, transform_indices = @transform_0, window_bounds = array<i64: 16, 32>}, {pipeline_mode = #tpu.pipeline_mode<synchronous>, transform_indices = @transform_1, window_bounds = array<i64: 2, 32>}, {pipeline_mode = #tpu.pipeline_mode<synchronous>, transform_indices = @transform_2, window_bounds = array<i64: 16, 32>}]} {
    %c0 = arith.constant 0 : index
    %c0_0 = arith.constant 0 : index
    %0 = vector.load %arg1[%c0, %c0_0] : memref<16x32xf32, #tpu.memory_space<vmem>>, vector<16x32xf32>
    %cst = arith.constant dense<0.000000e+00> : vector<32xf32>
    %1 = vector.multi_reduction <add>, %0, %cst [0] : vector<16x32xf32> to vector<32xf32>
    %2 = vector.shape_cast %1 : vector<32xf32> to vector<1x32xf32>
    %cst_1 = arith.constant 6.250000e-02 : f32
    %3 = vector.broadcast %cst_1 : f32 to vector<1x32xf32>
    %4 = arith.mulf %2, %3 : vector<1x32xf32>
    %5 = vector.broadcast %4 : vector<1x32xf32> to vector<16x32xf32>
    %6 = arith.subf %0, %5 : vector<16x32xf32>
    %7 = arith.mulf %6, %6 : vector<16x32xf32>
    %cst_2 = arith.constant dense<0.000000e+00> : vector<32xf32>
    %8 = vector.multi_reduction <add>, %7, %cst_2 [0] : vector<16x32xf32> to vector<32xf32>
    %9 = vector.shape_cast %8 : vector<32xf32> to vector<1x32xf32>
    %cst_3 = arith.constant 6.250000e-02 : f32
    %10 = vector.broadcast %cst_3 : f32 to vector<1x32xf32>
    %11 = arith.mulf %9, %10 : vector<1x32xf32>
    %c0_4 = arith.constant 0 : index
    %c0_5 = arith.constant 0 : index
    %12 = vector.load %arg2[%c0_4, %c0_5] : memref<2x32xf32, #tpu.memory_space<vmem>>, vector<1x32xf32>
    %cst_6 = arith.constant 9.99999974E-6 : f32
    %13 = vector.broadcast %cst_6 : f32 to vector<1x32xf32>
    %14 = arith.addf %11, %13 : vector<1x32xf32>
    %15 = math.rsqrt %14 : vector<1x32xf32>
    %16 = arith.mulf %12, %15 : vector<1x32xf32>
    %17 = vector.broadcast %16 : vector<1x32xf32> to vector<16x32xf32>
    %18 = arith.mulf %6, %17 : vector<16x32xf32>
    %c1 = arith.constant 1 : index
    %c0_7 = arith.constant 0 : index
    %19 = vector.load %arg2[%c1, %c0_7] : memref<2x32xf32, #tpu.memory_space<vmem>>, vector<1x32xf32>
    %20 = vector.broadcast %19 : vector<1x32xf32> to vector<16x32xf32>
    %21 = arith.addf %18, %20 : vector<16x32xf32>
    %c0_8 = arith.constant 0 : index
    %c0_9 = arith.constant 0 : index
    %22 = vector.load %arg3[%c0_8, %c0_9] : memref<16x32xf32, #tpu.memory_space<vmem>>, vector<16x32xf32>
    tpu.vector_store %arg3[%c0_8, %c0_9], %21 {strides = array<i32>} : memref<16x32xf32, #tpu.memory_space<vmem>>, vector<16x32xf32>,
    return
  }
  func.func @transform_0(%arg0: i32) -> (i32, i32) {
    %c0_i32 = arith.constant 0 : i32
    %c0_i32_0 = arith.constant 0 : i32
    %c0_i32_1 = arith.constant 0 : i32
    return %c0_i32, %c0_i32_0 : i32, i32
  }
  func.func @transform_1(%arg0: i32) -> (i32, i32) {
    %c0_i32 = arith.constant 0 : i32
    %c0_i32_0 = arith.constant 0 : i32
    %c0_i32_1 = arith.constant 0 : i32
    return %c0_i32, %c0_i32_0 : i32, i32
  }
  func.func @transform_2(%arg0: i32) -> (i32, i32) {
    %c0_i32 = arith.constant 0 : i32
    %c0_i32_0 = arith.constant 0 : i32
    %c0_i32_1 = arith.constant 0 : i32
    return %c0_i32, %c0_i32_0 : i32, i32
  }
}

</mosaic_0001>

<llo_original>
// kernel: tpu_custom_call.1
$region0: #{tpu_custom_call.1}
  #allocation0 [shape = 'u32[]', space=smem, size = 0x4, offset = 0x4, fixed_abs, tag = 'smem constant byte address 0x4 - core index']
  #allocation1 [shape = 'u32[144,128]{1,0:T(1,128)}', space=vmem, size = 0x12000, scoped, tag = 'internal scratch']
  %s0 = inlined_call_operand.hbm [shape: f32[16,32], index: 0, kind: input, shape index: {}]
  %s1 = inlined_call_operand.hbm [shape: f32[2,32], index: 1, kind: input, shape index: {}]
  %s2 = inlined_call_operand.hbm [shape: f32[16,32], index: 2, kind: output, shape index: {}]
  %s3 = sld [smem:[#allocation0]]
  $region26: #{tpu_custom_call.1} parent=0
    _
  %s5 = ssub.s32 1, %s3
  %s6 = scalar_select 0, %s5, %s3
  $region1: #{tpu_custom_call.1} parent=0
    #allocation2 [shape = 'u8[8192]{0}', space=vmem, size = 0x2000, scoped, tag = 'input window, operand 0, single buffered']
    #allocation3 [shape = 's32[1]{0}', space=sflag, size = 0x4, scoped, tag = 'scoped memory for tpu_custom_call.1']
    #allocation4 [shape = 's32[1]{0}', space=sflag, size = 0x4, scoped, tag = 'scoped memory for tpu_custom_call.1']
    #allocation5 [shape = 'u8[1024]{0}', space=vmem, size = 0x400, scoped, tag = 'input window, operand 1, single buffered']
    #allocation6 [shape = 's32[1]{0}', space=sflag, size = 0x4, scoped, tag = 'scoped memory for tpu_custom_call.1']
    #allocation7 [shape = 'u8[8192]{0}', space=vmem, size = 0x2000, scoped, tag = 'output window, operand 0, single buffered']
    %7 = vsyncpa [#allocation3], 0
    %8 = vsyncpa [#allocation6], 0
    %9 = vsyncpa [#allocation4], 0
    // Predicated region
    $region2: #{tpu_custom_call.1} parent=1 // pred_check
      _
    $region3: #{tpu_custom_call.1} parent=1 // pred_check_branch
      %11 = sbr.rel (0) target = $region5
    $region4: #{tpu_custom_call.1} parent=1 // pred_region
      %s13 = ssub.s32 256, 256
      %14 = vsyncadd [#allocation3], %s13
      %s15 = sshll.u32 [#allocation2], 4
      %s16 = int_to_ptr.vmem [resolvable:$true] %s15
      %21 = dma.hbm_to_vmem [thread:$0]  %s0, 256, %s16, [#allocation3], 128, 128, 8
    $region5: #{tpu_custom_call.1} parent=1 // pred_fallthru
      _
    // Predicated region
    $region6: #{tpu_custom_call.1} parent=1 // pred_check
      _
    $region7: #{tpu_custom_call.1} parent=1 // pred_check_branch
      %23 = sbr.rel (0) target = $region9
    $region8: #{tpu_custom_call.1} parent=1 // pred_region
      %s25 = ssub.s32 32, 32
      %26 = vsyncadd [#allocation6], %s25
      %s28 = sshll.u32 [#allocation5], 4
      %s29 = int_to_ptr.vmem [resolvable:$true] %s28
      %31 = dma.hbm_to_vmem [thread:$0]  %s1, 32, %s29, [#allocation6]
    $region9: #{tpu_custom_call.1} parent=1 // pred_fallthru
      _
    // Predicated region
    $region10: #{tpu_custom_call.1} parent=1 // pred_check
      _
    $region11: #{tpu_custom_call.1} parent=1 // pred_check_branch
      %33 = sbr.rel (0) target = $region13
    $region12: #{tpu_custom_call.1} parent=1 // pred_region
      %34 = dma.done [#allocation3], 256
    $region13: #{tpu_custom_call.1} parent=1 // pred_fallthru
      _
    // Predicated region
    $region14: #{tpu_custom_call.1} parent=1 // pred_check
      _
    $region15: #{tpu_custom_call.1} parent=1 // pred_check_branch
      %36 = sbr.rel (0) target = $region17
    $region16: #{tpu_custom_call.1} parent=1 // pred_region
      %37 = dma.done [#allocation6], 32
    $region17: #{tpu_custom_call.1} parent=1 // pred_fallthru
      _
    %v38 = vld [vmem:[#allocation2] sm:$0xff]
    %v39 = vld [vmem:[#allocation2 + $0x8] sm:$0xff]
    %vm40 = vcmask 261120
    %v41 = vsel %vm40, %v38, 0.0
    %v42 = vsel %vm40, %v39, 0.0
    %v43 = vadd.f32 %v41, %v42
    %v44 = vrot.slane %v43, 4
    %v45 = vadd.f32 %v43, %v44
    %v46 = vrot.slane %v45, 2
    %v47 = vadd.f32 %v45, %v46
    %v48 = vrot.slane %v47, 1
    %v49 = vadd.f32 %v47, %v48
    %v50 = vmul.f32 %v49, 0.0625
    %v51 = vsub.f32 %v38, %v50
    %v52 = vsub.f32 %v39, %v50
    %v53 = vmul.f32 %v51, %v51
    %v54 = vmul.f32 %v52, %v52
    %v55 = vsel %vm40, %v53, 0.0
    %v56 = vsel %vm40, %v54, 0.0
    %v57 = vadd.f32 %v55, %v56
    %v58 = vrot.slane %v57, 4
    %v59 = vadd.f32 %v57, %v58
    %v60 = vrot.slane %v59, 2
    %v61 = vadd.f32 %v59, %v60
    %v62 = vrot.slane %v61, 1
    %v63 = vadd.f32 %v61, %v62
    %v64 = vmul.f32 %v63, 0.0625
    %v65 = vld [vmem:[#allocation5] sm:$0x1]
    %v66 = vadd.f32 %v64, 1e-05
    %v67 = vrsqrt.pop %v66
    %v68 = vmul.f32 %v65, %v67
    %v69 = vlaneseq
    %v70 = vshrl.u32 %v69, 7
    %v71 = vsub.s32 0, %v70
    %v72 = vrot.slane %v68, %v71
    %v73 = vmul.f32 %v51, %v72
    %v74 = vmul.f32 %v52, %v72
    %v75 = vld [vmem:[#allocation5 + $0x1] sm:$0x1]
    %v76 = vlaneseq
    %v77 = vshrl.u32 %v76, 7
    %v78 = vsub.s32 0, %v77
    %v79 = vrot.slane %v75, %v78
    %v80 = vadd.f32 %v73, %v79
    %v81 = vadd.f32 %v74, %v79
    %82 = vst.msk [vmem:[#allocation7] sm:$0xff] %vm40, %v80
    %83 = vst.msk [vmem:[#allocation7 + $0x8] sm:$0xff] %vm40, %v81
    // Predicated region
    $region18: #{tpu_custom_call.1} parent=1 // pred_check
      _
    $region19: #{tpu_custom_call.1} parent=1 // pred_check_branch
      %85 = sbr.rel (0) target = $region21
    $region20: #{tpu_custom_call.1} parent=1 // pred_region
      %s87 = ssub.s32 256, 256
      %88 = vsyncadd [#allocation4], %s87
      %s89 = sshll.u32 [#allocation7], 4
      %s90 = int_to_ptr.vmem [resolvable:$true] %s89
      %95 = dma.vmem_to_hbm [thread:$0]  %s90, 256, %s2, [#allocation4], 128, 128, 8
    $region21: #{tpu_custom_call.1} parent=1 // pred_fallthru
      _
    // Predicated region
    $region22: #{tpu_custom_call.1} parent=1 // pred_check
      _
    $region23: #{tpu_custom_call.1} parent=1 // pred_check_branch
      %97 = sbr.rel (0) target = $region25
    $region24: #{tpu_custom_call.1} parent=1 // pred_region
      %98 = dma.done [#allocation4], 256
    $region25: #{tpu_custom_call.1} parent=1 // pred_fallthru
      _
    %99 = vsyncpa [#allocation3], 1
    %100 = vsyncpa [#allocation6], 1
    %101 = vsyncpa [#allocation4], 1

</llo_original>
